<compile_context>
chip_gen: v7x
topology: tpu7x:2x2x1
jax: 0.10.0
libtpu: 0.0.40
codegen_flags: <defaults>
</compile_context>

<pallas_src>
import jax
import jax.numpy as jnp
from jax.experimental import pallas as pl
from jax.experimental.pallas import tpu as pltpu

LATENT_DIM = 2
N_CLASSES = 10
HIDDEN = 256
OUT_DIM = 28 * 28      # 784
OUT_PAD = 7 * 128      # 896 — lane-dense output width (multiple of 128)


def _round_up(x, m):
    return (x + m - 1) // m * m


def _decoder_kernel(z_ref, y_ref, w1z_ref, w1c_ref, b1_ref, w2_ref, b2_ref, out_ref):
    # z: (TB, 2) f32, y: (TB, 1) i32
    # w1z: (2, 256), w1c: (10, 256), b1: (1, 256)
    # w2: (256, 896) [f32 or bf16], b2: (1, 896) f32, out: (TB, 896) f32
    z = z_ref[...]
    yid = y_ref[...]
    tb = z.shape[0]

    # One-hot built in-kernel (VPU compare); replaces the (B, 12) concat input.
    cls_iota = jax.lax.broadcasted_iota(jnp.int32, (tb, N_CLASSES), 1)
    onehot = (cls_iota == yid).astype(jnp.float32)               # (TB, 10)

    # First layer: z @ w1[:2] + onehot @ w1[2:] + b1, then ReLU.
    h = jnp.dot(z, w1z_ref[...], preferred_element_type=jnp.float32)
    h = h + jnp.dot(onehot, w1c_ref[...], preferred_element_type=jnp.float32)
    h = h + b1_ref[...]
    h = jnp.maximum(h, 0.0)

    # Second layer (dominant matmul) + bias + sigmoid, all fused in-kernel.
    w2 = w2_ref[...]
    h = h.astype(w2.dtype)                                       # f32 or bf16 operands
    o = jnp.dot(h, w2, preferred_element_type=jnp.float32) + b2_ref[...]
    out_ref[...] = jax.nn.sigmoid(o)                             # EUP, overlaps with MXU


def mlp_decoder_forward(z, y, params, *, block_b=512, use_bf16=False):
    """z: (B, 2) f32, y: (B,) int labels in [0, 10). Returns (B, 1, 28, 28) f32."""
    w1, b1, w2, b2 = params
    B = z.shape[0]

    # --- weight prep (layout plumbing, fused by XLA, one-time per call) ---
    w1z = w1[:LATENT_DIM, :]                                     # (2, 256)
    w1c = w1[LATENT_DIM:, :]                                     # (10, 256)
    w2p = jnp.pad(w2, ((0, 0), (0, OUT_PAD - OUT_DIM)))          # (256, 896)
    b2p = jnp.pad(b2, ((0, 0), (0, OUT_PAD - OUT_DIM)))          # (1, 896)
    if use_bf16:
        # v6e/v7x MXU fast path; breaks 1e-5 parity with the f32 reference.
        w2p = w2p.astype(jnp.bfloat16)

    # --- batch tiling: pad B to a multiple of the tile (tile is a multiple of 8) ---
    TB = min(block_b, _round_up(B, 8))
    Bp = _round_up(B, TB)
    if Bp != B:
        z = jnp.pad(z, ((0, Bp - B), (0, 0)))
        y = jnp.pad(y, ((0, Bp - B),))
    y2 = y.astype(jnp.int32).reshape(Bp, 1)

    grid = (Bp // TB,)

    flops = 2 * Bp * (LATENT_DIM * HIDDEN + N_CLASSES * HIDDEN + HIDDEN * OUT_PAD)
    bytes_accessed = (
        4 * Bp * (LATENT_DIM + 1 + OUT_PAD)                       # activations in/out
        + 4 * (LATENT_DIM + N_CLASSES + 1) * HIDDEN               # w1 + b1
        + w2p.size * w2p.dtype.itemsize + 4 * OUT_PAD             # w2 + b2
    )

    out_flat = pl.pallas_call(
        _decoder_kernel,
        out_shape=jax.ShapeDtypeStruct((Bp, OUT_PAD), jnp.float32),
        grid=grid,
        in_specs=[
            pl.BlockSpec((TB, LATENT_DIM), lambda i: (i, 0)),     # z tile
            pl.BlockSpec((TB, 1), lambda i: (i, 0)),              # labels tile
            pl.BlockSpec((LATENT_DIM, HIDDEN), lambda i: (0, 0)),  # w1[:2]   (resident)
            pl.BlockSpec((N_CLASSES, HIDDEN), lambda i: (0, 0)),   # w1[2:]   (resident)
            pl.BlockSpec((1, HIDDEN), lambda i: (0, 0)),           # b1       (resident)
            pl.BlockSpec((HIDDEN, OUT_PAD), lambda i: (0, 0)),     # w2 padded (resident)
            pl.BlockSpec((1, OUT_PAD), lambda i: (0, 0)),          # b2 padded (resident)
        ],
        out_specs=pl.BlockSpec((TB, OUT_PAD), lambda i: (i, 0)),
        compiler_params=pltpu.CompilerParams(
            dimension_semantics=("parallel",),                     # megacore sharding on v7x
        ),
        cost_estimate=pl.CostEstimate(
            flops=flops,
            transcendentals=Bp * OUT_PAD,
            bytes_accessed=bytes_accessed,
        ),
    )(z, y2, w1z, w1c, b1, w2p, b2p)

    # Slice padded rows/cols away, then Unflatten(dim=1, (1, 28, 28)) -> NCHW.
    return out_flat[:B, :OUT_DIM].reshape(B, 1, 28, 28)


def init_params(key):
    """Deterministic synthetic init matching nn.Linear shapes.

    PyTorch stores Linear weights as (out, in); we keep them as (in, out) so the
    kernel computes x @ W + b (mathematically identical to x @ W_pt^T + b).
    """
    k1, k2, k3, k4 = jax.random.split(key, 4)
    in1 = LATENT_DIM + N_CLASSES
    bound1 = 1.0 / jnp.sqrt(in1)
    bound2 = 1.0 / jnp.sqrt(HIDDEN)
    w1 = jax.random.uniform(k1, (in1, HIDDEN), jnp.float32, -bound1, bound1)
    b1 = jax.random.uniform(k2, (1, HIDDEN), jnp.float32, -bound1, bound1)
    w2 = jax.random.uniform(k3, (HIDDEN, OUT_DIM), jnp.float32, -bound2, bound2)
    b2 = jax.random.uniform(k4, (1, OUT_DIM), jnp.float32, -bound2, bound2)
    return w1, b1, w2, b2


if __name__ == "__main__":
    key = jax.random.PRNGKey(0)
    kp, kz, ky = jax.random.split(key, 3)

    B = 2  # tiny smoke-test batch; real wins appear at B >= a few hundred
    params = init_params(kp)
    z = jax.random.normal(kz, (B, LATENT_DIM), jnp.float32)
    y = jax.random.randint(ky, (B,), 0, N_CLASSES, jnp.int32)

    out = mlp_decoder_forward(z, y, params)  # f32 path: exact parity with reference
    out = jax.block_until_ready(out)

    # Pure-JAX reference of the same math (PyTorch-equivalent forward).
    w1, b1, w2, b2 = params
    x = jnp.concatenate([z, jax.nn.one_hot(y, N_CLASSES, dtype=z.dtype)], -1)
    ref = jax.nn.sigmoid(jnp.maximum(x @ w1 + b1, 0.0) @ w2 + b2).reshape(B, 1, 28, 28)
    assert out.shape == (B, 1, 28, 28)
    assert jnp.allclose(out, ref, atol=1e-5), "mismatch vs reference"

    print("KERNEL_OK")
</pallas_src>

<mosaic_0001>
module attributes {stable_mosaic.version = 11 : i64} {
  func.func @_decoder_kernel(%arg0: i32, %arg1: memref<8x2xf32, #tpu.memory_space<vmem>>, %arg2: memref<8x1xi32, #tpu.memory_space<vmem>>, %arg3: memref<2x256xf32, #tpu.memory_space<vmem>>, %arg4: memref<10x256xf32, #tpu.memory_space<vmem>>, %arg5: memref<1x256xf32, #tpu.memory_space<vmem>>, %arg6: memref<256x896xf32, #tpu.memory_space<vmem>>, %arg7: memref<1x896xf32, #tpu.memory_space<vmem>>, %arg8: memref<8x896xf32, #tpu.memory_space<vmem>>) attributes {dimension_semantics = [#tpu.dimension_semantics<parallel>], iteration_bounds = array<i64: 1>, scalar_prefetch = 0 : i64, scratch_operands = 0 : i64, tpu.core_type = #tpu.core_type<tc>, window_params = [{transform_indices = @transform_0, window_bounds = array<i64: 8, 2>}, {transform_indices = @transform_1, window_bounds = array<i64: 8, 1>}, {pipeline_mode = #tpu.pipeline_mode<synchronous>, transform_indices = @transform_2, window_bounds = array<i64: 2, 256>}, {pipeline_mode = #tpu.pipeline_mode<synchronous>, transform_indices = @transform_3, window_bounds = array<i64: 10, 256>}, {pipeline_mode = #tpu.pipeline_mode<synchronous>, transform_indices = @transform_4, window_bounds = array<i64: 1, 256>}, {pipeline_mode = #tpu.pipeline_mode<synchronous>, transform_indices = @transform_5, window_bounds = array<i64: 256, 896>}, {pipeline_mode = #tpu.pipeline_mode<synchronous>, transform_indices = @transform_6, window_bounds = array<i64: 1, 896>}, {transform_indices = @transform_7, window_bounds = array<i64: 8, 896>}]} {
    %c0 = arith.constant 0 : index
    %c0_0 = arith.constant 0 : index
    %0 = vector.load %arg1[%c0, %c0_0] : memref<8x2xf32, #tpu.memory_space<vmem>>, vector<8x2xf32>
    %c0_1 = arith.constant 0 : index
    %c0_2 = arith.constant 0 : index
    %1 = vector.load %arg2[%c0_1, %c0_2] : memref<8x1xi32, #tpu.memory_space<vmem>>, vector<8x1xi32>
    %2 = tpu.iota {dimensions = array<i32: 1>} : vector<8x10xi32>
    %3 = vector.broadcast %1 : vector<8x1xi32> to vector<8x10xi32>
    %4 = arith.cmpi eq, %2, %3 : vector<8x10xi32>
    %5 = arith.extui %4 : vector<8x10xi1> to vector<8x10xi32>
    %6 = arith.sitofp %5 : vector<8x10xi32> to vector<8x10xf32>
    %c0_3 = arith.constant 0 : index
    %c0_4 = arith.constant 0 : index
    %7 = vector.load %arg3[%c0_3, %c0_4] : memref<2x256xf32, #tpu.memory_space<vmem>>, vector<2x256xf32>
    %cst = arith.constant dense<0.000000e+00> : vector<8x256xf32>
    %8 = tpu.matmul %0, %7, %cst {dimension_numbers = #tpu.dot_dimension_numbers<[1], [0], [0], [1], [0, 0, 1, 1], [], []>} : vector<8x2xf32>, vector<2x256xf32>, vector<8x256xf32> -> vector<8x256xf32>
    %c0_5 = arith.constant 0 : index
    %c0_6 = arith.constant 0 : index
    %9 = vector.load %arg4[%c0_5, %c0_6] : memref<10x256xf32, #tpu.memory_space<vmem>>, vector<10x256xf32>
    %cst_7 = arith.constant dense<0.000000e+00> : vector<8x256xf32>
    %10 = tpu.matmul %6, %9, %cst_7 {dimension_numbers = #tpu.dot_dimension_numbers<[1], [0], [0], [1], [0, 0, 1, 1], [], []>} : vector<8x10xf32>, vector<10x256xf32>, vector<8x256xf32> -> vector<8x256xf32>
    %11 = arith.addf %8, %10 : vector<8x256xf32>
    %c0_8 = arith.constant 0 : index
    %c0_9 = arith.constant 0 : index
    %12 = vector.load %arg5[%c0_8, %c0_9] : memref<1x256xf32, #tpu.memory_space<vmem>>, vector<1x256xf32>
    %13 = vector.broadcast %12 : vector<1x256xf32> to vector<8x256xf32>
    %14 = arith.addf %11, %13 : vector<8x256xf32>
    %cst_10 = arith.constant 0.000000e+00 : f32
    %15 = vector.broadcast %cst_10 : f32 to vector<8x256xf32>
    %16 = arith.maximumf %14, %15 : vector<8x256xf32>
    %c0_11 = arith.constant 0 : index
    %c0_12 = arith.constant 0 : index
    %17 = vector.load %arg6[%c0_11, %c0_12] : memref<256x896xf32, #tpu.memory_space<vmem>>, vector<256x896xf32>
    %cst_13 = arith.constant dense<0.000000e+00> : vector<8x896xf32>
    %18 = tpu.matmul %16, %17, %cst_13 {dimension_numbers = #tpu.dot_dimension_numbers<[1], [0], [0], [1], [0, 0, 1, 1], [], []>} : vector<8x256xf32>, vector<256x896xf32>, vector<8x896xf32> -> vector<8x896xf32>
    %c0_14 = arith.constant 0 : index
    %c0_15 = arith.constant 0 : index
    %19 = vector.load %arg7[%c0_14, %c0_15] : memref<1x896xf32, #tpu.memory_space<vmem>>, vector<1x896xf32>
    %20 = vector.broadcast %19 : vector<1x896xf32> to vector<8x896xf32>
    %21 = arith.addf %18, %20 : vector<8x896xf32>
    %22 = arith.negf %21 : vector<8x896xf32>
    %23 = math.exp %22 : vector<8x896xf32>
    %cst_16 = arith.constant 1.000000e+00 : f32
    %24 = vector.broadcast %cst_16 : f32 to vector<8x896xf32>
    %25 = arith.addf %24, %23 : vector<8x896xf32>
    %26 = arith.divf %24, %25 : vector<8x896xf32>
    %c0_17 = arith.constant 0 : index
    %c0_18 = arith.constant 0 : index
    %27 = vector.load %arg8[%c0_17, %c0_18] : memref<8x896xf32, #tpu.memory_space<vmem>>, vector<8x896xf32>
    tpu.vector_store %arg8[%c0_17, %c0_18], %26 {strides = array<i32>} : memref<8x896xf32, #tpu.memory_space<vmem>>, vector<8x896xf32>,
    return
  }
  func.func @transform_0(%arg0: i32) -> (i32, i32) {
    %c0_i32 = arith.constant 0 : i32
    %c0_i32_0 = arith.constant 0 : i32
    return %arg0, %c0_i32 : i32, i32
  }
  func.func @transform_1(%arg0: i32) -> (i32, i32) {
    %c0_i32 = arith.constant 0 : i32
    %c0_i32_0 = arith.constant 0 : i32
    return %arg0, %c0_i32 : i32, i32
  }
  func.func @transform_2(%arg0: i32) -> (i32, i32) {
    %c0_i32 = arith.constant 0 : i32
    %c0_i32_0 = arith.constant 0 : i32
    %c0_i32_1 = arith.constant 0 : i32
    return %c0_i32, %c0_i32_0 : i32, i32
  }
  func.func @transform_3(%arg0: i32) -> (i32, i32) {
    %c0_i32 = arith.constant 0 : i32
    %c0_i32_0 = arith.constant 0 : i32
    %c0_i32_1 = arith.constant 0 : i32
    return %c0_i32, %c0_i32_0 : i32, i32
  }
  func.func @transform_4(%arg0: i32) -> (i32, i32) {
    %c0_i32 = arith.constant 0 : i32
    %c0_i32_0 = arith.constant 0 : i32
    %c0_i32_1 = arith.constant 0 : i32
    return %c0_i32, %c0_i32_0 : i32, i32
  }
  func.func @transform_5(%arg0: i32) -> (i32, i32) {
    %c0_i32 = arith.constant 0 : i32
    %c0_i32_0 = arith.constant 0 : i32
    %c0_i32_1 = arith.constant 0 : i32
    return %c0_i32, %c0_i32_0 : i32, i32
  }
  func.func @transform_6(%arg0: i32) -> (i32, i32) {
    %c0_i32 = arith.constant 0 : i32
    %c0_i32_0 = arith.constant 0 : i32
    %c0_i32_1 = arith.constant 0 : i32
    return %c0_i32, %c0_i32_0 : i32, i32
  }
  func.func @transform_7(%arg0: i32) -> (i32, i32) {
    %c0_i32 = arith.constant 0 : i32
    %c0_i32_0 = arith.constant 0 : i32
    return %arg0, %c0_i32 : i32, i32
  }
}

</mosaic_0001>

<llo_original>
// kernel: tpu_custom_call.1
$region0: #{tpu_custom_call.1}
  #allocation0 [shape = 'u32[]', space=smem, size = 0x4, offset = 0x4, fixed_abs, tag = 'smem constant byte address 0x4 - core index']
  #allocation1 [shape = 'u32[144,128]{1,0:T(1,128)}', space=vmem, size = 0x12000, scoped, tag = 'internal scratch']
  %s0 = inlined_call_operand.vmem [shape: f32[8,2], index: 0, kind: input, shape index: {}]
  %s1 = inlined_call_operand.vmem [shape: s32[8,1], index: 1, kind: input, shape index: {}]
  %s2 = inlined_call_operand.vmem [shape: f32[2,256], index: 2, kind: input, shape index: {}]
  %s3 = inlined_call_operand.hbm [shape: f32[10,256], index: 3, kind: input, shape index: {}]
  %s4 = inlined_call_operand.vmem [shape: f32[1,256], index: 4, kind: input, shape index: {}]
  %s5 = inlined_call_operand.hbm [shape: f32[256,896], index: 5, kind: input, shape index: {}]
  %s6 = inlined_call_operand.vmem [shape: f32[1,896], index: 6, kind: input, shape index: {}]
  %s7 = inlined_call_operand.hbm [shape: f32[8,896], index: 7, kind: output, shape index: {}]
  %s8 = sld [smem:[#allocation0]]
  $region46: #{tpu_custom_call.1} parent=0
    _
  %s10 = ssub.s32 1, %s8
  %s11 = scalar_select 0, %s10, %s8
  $region1: #{tpu_custom_call.1} parent=0
    #allocation2 [shape = 'u8[16384]{0}', space=vmem, size = 0x4000, scoped, tag = 'input window, operand 3, single buffered']
    #allocation3 [shape = 's32[1]{0}', space=sflag, size = 0x4, scoped, tag = 'scoped memory for tpu_custom_call.1']
    #allocation4 [shape = 's32[1]{0}', space=sflag, size = 0x4, scoped, tag = 'scoped memory for tpu_custom_call.1']
    #allocation5 [shape = 'u8[917504]{0}', space=vmem, size = 0xe0000, scoped, tag = 'input window, operand 5, single buffered']
    #allocation6 [shape = 's32[1]{0}', space=sflag, size = 0x4, scoped, tag = 'scoped memory for tpu_custom_call.1']
    #allocation7 [shape = 'u8[28672]{0}', space=vmem, size = 0x7000, scoped, tag = 'output window, operand 0, single buffered']
    %12 = vsyncpa [#allocation3], 0
    %13 = vsyncpa [#allocation6], 0
    %14 = vsyncpa [#allocation4], 0
    // Predicated region
    $region2: #{tpu_custom_call.1} parent=1 // pred_check
      _
    $region3: #{tpu_custom_call.1} parent=1 // pred_check_branch
      %16 = sbr.rel (0) target = $region5
    $region4: #{tpu_custom_call.1} parent=1 // pred_region
      _
    $region5: #{tpu_custom_call.1} parent=1 // pred_fallthru
      _
    // Predicated region
    $region6: #{tpu_custom_call.1} parent=1 // pred_check
      _
    $region7: #{tpu_custom_call.1} parent=1 // pred_check_branch
      %18 = sbr.rel (0) target = $region9
    $region8: #{tpu_custom_call.1} parent=1 // pred_region
      _
    $region9: #{tpu_custom_call.1} parent=1 // pred_fallthru
      _
    // Predicated region
    $region10: #{tpu_custom_call.1} parent=1 // pred_check
      _
    $region11: #{tpu_custom_call.1} parent=1 // pred_check_branch
      %20 = sbr.rel (0) target = $region13
    $region12: #{tpu_custom_call.1} parent=1 // pred_region
      _
    $region13: #{tpu_custom_call.1} parent=1 // pred_fallthru
      _
    // Predicated region
    $region14: #{tpu_custom_call.1} parent=1 // pred_check
      _
    $region15: #{tpu_custom_call.1} parent=1 // pred_check_branch
      %22 = sbr.rel (0) target = $region17
    $region16: #{tpu_custom_call.1} parent=1 // pred_region
      %s24 = ssub.s32 512, 512
      %25 = vsyncadd [#allocation3], %s24
      %s26 = sshll.u32 [#allocation2], 4
      %s27 = int_to_ptr.vmem [resolvable:$true] %s26
      %32 = dma.hbm_to_vmem [thread:$0]  %s3, 512, %s27, [#allocation3], 256, 256, 16
    $region17: #{tpu_custom_call.1} parent=1 // pred_fallthru
      _
    // Predicated region
    $region18: #{tpu_custom_call.1} parent=1 // pred_check
      _
    $region19: #{tpu_custom_call.1} parent=1 // pred_check_branch
      %34 = sbr.rel (0) target = $region21
    $region20: #{tpu_custom_call.1} parent=1 // pred_region
      _
    $region21: #{tpu_custom_call.1} parent=1 // pred_fallthru
      _
    // Predicated region
    $region22: #{tpu_custom_call.1} parent=1 // pred_check
      _
    $region23: #{tpu_custom_call.1} parent=1 // pred_check_branch
      %36 = sbr.rel (0) target = $region25
    $region24: #{tpu_custom_call.1} parent=1 // pred_region
      %s38 = ssub.s32 28672, 28672
      %39 = vsyncadd [#allocation6], %s38
      %s40 = sshll.u32 [#allocation5], 4
      %s41 = int_to_ptr.vmem [resolvable:$true] %s40
      %46 = dma.hbm_to_vmem [thread:$0]  %s5, 28672, %s41, [#allocation6], 896, 896, 56
    $region25: #{tpu_custom_call.1} parent=1 // pred_fallthru
      _
    // Predicated region
    $region26: #{tpu_custom_call.1} parent=1 // pred_check
      _
    $region27: #{tpu_custom_call.1} parent=1 // pred_check_branch
      %48 = sbr.rel (0) target = $region29
    $region28: #{tpu_custom_call.1} parent=1 // pred_region
      _
    $region29: #{tpu_custom_call.1} parent=1 // pred_fallthru
      _
    // Predicated region
    $region30: #{tpu_custom_call.1} parent=1 // pred_check
      _
    $region31: #{tpu_custom_call.1} parent=1 // pred_check_branch
      %50 = sbr.rel (0) target = $region33
    $region32: #{tpu_custom_call.1} parent=1 // pred_region
      %51 = dma.done [#allocation3], 512
    $region33: #{tpu_custom_call.1} parent=1 // pred_fallthru
      _
    // Predicated region
    $region34: #{tpu_custom_call.1} parent=1 // pred_check
      _
    $region35: #{tpu_custom_call.1} parent=1 // pred_check_branch
      %53 = sbr.rel (0) target = $region37
    $region36: #{tpu_custom_call.1} parent=1 // pred_region
      %54 = dma.done [#allocation6], 28672
    $region37: #{tpu_custom_call.1} parent=1 // pred_fallthru
      _
    %v55 = vld [vmem:[%s0] sm:$0xff]
    %v56 = vld [vmem:[%s1] sm:$0xff]
    %v57 = vlaneseq
    %v58 = vand.u32 %v57, 127
    %59 = vset.pattern.permute.xlu0 0
    %60 = vperm.xlu0 %59, %v56
    %v61 = vpop.permute.xlu0 %60
    %vm62 = vcmp.eq.s32.totalorder %v58, %v61
    %v63 = vsel %vm62, 1, 0
    %v64 = vcvt.s32.f32 %v63
    %v65 = vld [vmem:[%s2] sm:$0xf]
    %v66 = vld [vmem:[#allocation2] sm:$0xff]
    %v67 = vld [vmem:[#allocation2 + $0x8] sm:$0xff]
    %v68 = vld [vmem:[#allocation2 + $0x10] sm:$0x3]
    %v69 = vld [vmem:[#allocation2 + $0x18] sm:$0x3]
    %vm70 = vcmask 80896
    %v72 = vsel %vm70, %v64, 0
    %vm74 = vcmask 1041408
    %v76 = vsel %vm74, %v68, 0
    %v79 = vsel %vm74, %v69, 0
    %81 = vmatprep.subr.mxu0 %v67
    %82 = vmatpush1.msra.mxu0 %v66
    %83 = vmatprep.subr.mxu0 %v79
    %84 = vmatpush1.msra.mxu0 %v76
    %85 = vmatprep.subr.mxu0 0.0
    %86 = vmatpush1.msra.mxu0 0.0
    %87 = vmatprep.subr.mxu0 0.0
    %88 = vmatpush1.msra.mxu0 0.0
    %89 = vmatprep.subr.mxu0 0.0
    %90 = vmatpush1.msra.mxu0 0.0
    %91 = vmatprep.subr.mxu0 0.0
    %92 = vmatpush1.msra.mxu0 0.0
    %93 = vmatprep.subr.mxu0 0.0
    %94 = vmatpush1.msra.mxu0 0.0
    %95 = vmatprep.subr.mxu0 0.0
    %96 = vmatpush1.msra.mxu0 0.0
    %97 = vmatprep.subr.mxu0 0.0
    %98 = vmatpush1.msra.mxu0 0.0
    %99 = vmatprep.subr.mxu0 0.0
    %100 = vmatpush1.msra.mxu0 0.0
    %101 = vmatprep.subr.mxu0 0.0
    %102 = vmatpush1.msra.mxu0 0.0
    %103 = vmatprep.subr.mxu0 0.0
    %104 = vmatpush1.msra.mxu0 0.0
    %105 = vmatprep.subr.mxu0 0.0
    %106 = vmatpush1.msra.mxu0 0.0
    %107 = vmatprep.subr.mxu0 0.0
    %108 = vmatpush1.msra.mxu0 0.0
    %109 = vmatprep.subr.mxu0 0.0
    %110 = vmatpush1.msra.mxu0 0.0
    %111 = vmatprep.subr.mxu0 0.0
    %112 = vmatpush1.msra.mxu0 0.0
    %113 = vmatprep.subr.mxu0 0.0
    %114 = vmatpush1.msra.mxu0 0.0
    %115 = vmatprep.subr.mxu0 0.0
    %116 = vmatpush1.msra.mxu0 0.0
    %117 = vmatprep.subr.mxu0 0.0
    %118 = vmatpush1.msra.mxu0 0.0
    %119 = vmatprep.subr.mxu0 0.0
    %120 = vmatpush1.msra.mxu0 0.0
    %121 = vmatprep.subr.mxu0 0.0
    %122 = vmatpush1.msra.mxu0 0.0
    %123 = vmatprep.subr.mxu0 0.0
    %124 = vmatpush1.msra.mxu0 0.0
    %125 = vmatprep.subr.mxu0 0.0
    %126 = vmatpush1.msra.mxu0 0.0
    %127 = vmatprep.subr.mxu0 0.0
    %128 = vmatpush1.msra.mxu0 0.0
    %129 = vmatprep.subr.mxu0 0.0
    %130 = vmatpush1.msra.mxu0 0.0
    %131 = vmatprep.subr.mxu0 0.0
    %132 = vmatpush1.msra.mxu0 0.0
    %133 = vmatprep.subr.mxu0 0.0
    %134 = vmatpush1.msra.mxu0 0.0
    %135 = vmatprep.subr.mxu0 0.0
    %136 = vmatpush1.msra.mxu0 0.0
    %137 = vmatprep.subr.mxu0 0.0
    %138 = vmatpush1.msra.mxu0 0.0
    %139 = vmatprep.subr.mxu0 0.0
    %140 = vmatpush1.msra.mxu0 0.0
    %141 = vmatprep.subr.mxu0 0.0
    %142 = vmatpush1.msra.mxu0 0.0
    %143 = vmatprep.subr.mxu0 0.0
    %144 = vmatpush1.msra.mxu0 0.0
    %145 = vmatprep.mubr.f32.mxu0 0.0
    %146 = vmatmul.mubr.f32.gmra.mrb[0].mxu0 %v72
    %v147 = vpop.f32.mrb[0].mxu0
    %v148 = vadd.f32 0.0, %v147
    %v149 = vpop.f32.mrb[0].mxu0
    %v150 = vadd.f32 0.0, %v149
    %151 = vdwg.mxu0
    %v154 = vunpack.c.l.s4 1983009808
    %v155 = vunpack.c.0.s8 %v154
    %v156 = vlaneseq
    %v157 = vshrl.u32 %v156, 7
    %v158 = vsub.s32 %v155, %v157
    %v159 = vrot.slane %v65, %v158
    %v160 = vcombine.high %v159, %v159
    %vm161 = vcmask 15360
    %v163 = vsel %vm161, %v55, 0
    %v165 = vsel %vm74, %v159, 0
    %v167 = vsel %vm74, %v160, 0
    %169 = vmatprep.subr.mxu0 %v167
    %170 = vmatpush1.msra.mxu0 %v165
    %171 = vmatprep.subr.mxu0 0.0
    %172 = vmatpush1.msra.mxu0 0.0
    %173 = vmatprep.subr.mxu0 0.0
    %174 = vmatpush1.msra.mxu0 0.0
    %175 = vmatprep.subr.mxu0 0.0
    %176 = vmatpush1.msra.mxu0 0.0
    %177 = vmatprep.subr.mxu0 0.0
    %178 = vmatpush1.msra.mxu0 0.0
    %179 = vmatprep.subr.mxu0 0.0
    %180 = vmatpush1.msra.mxu0 0.0
    %181 = vmatprep.subr.mxu0 0.0
    %182 = vmatpush1.msra.mxu0 0.0
    %183 = vmatprep.subr.mxu0 0.0
    %184 = vmatpush1.msra.mxu0 0.0
    %185 = vmatprep.subr.mxu0 0.0
    %186 = vmatpush1.msra.mxu0 0.0
    %187 = vmatprep.subr.mxu0 0.0
    %188 = vmatpush1.msra.mxu0 0.0
    %189 = vmatprep.subr.mxu0 0.0
    %190 = vmatpush1.msra.mxu0 0.0
    %191 = vmatprep.subr.mxu0 0.0
    %192 = vmatpush1.msra.mxu0 0.0
    %193 = vmatprep.subr.mxu0 0.0
    %194 = vmatpush1.msra.mxu0 0.0
    %195 = vmatprep.subr.mxu0 0.0
    %196 = vmatpush1.msra.mxu0 0.0
    %197 = vmatprep.subr.mxu0 0.0
    %198 = vmatpush1.msra.mxu0 0.0
    %199 = vmatprep.subr.mxu0 0.0
    %200 = vmatpush1.msra.mxu0 0.0
    %201 = vmatprep.subr.mxu0 0.0
    %202 = vmatpush1.msra.mxu0 0.0
    %203 = vmatprep.subr.mxu0 0.0
    %204 = vmatpush1.msra.mxu0 0.0
    %205 = vmatprep.subr.mxu0 0.0
    %206 = vmatpush1.msra.mxu0 0.0
    %207 = vmatprep.subr.mxu0 0.0
    %208 = vmatpush1.msra.mxu0 0.0
    %209 = vmatprep.subr.mxu0 0.0
    %210 = vmatpush1.msra.mxu0 0.0
    %211 = vmatprep.subr.mxu0 0.0
    %212 = vmatpush1.msra.mxu0 0.0
    %213 = vmatprep.subr.mxu0 0.0
    %214 = vmatpush1.msra.mxu0 0.0
    %215 = vmatprep.subr.mxu0 0.0
    %216 = vmatpush1.msra.mxu0 0.0
    %217 = vmatprep.subr.mxu0 0.0
    %218 = vmatpush1.msra.mxu0 0.0
    %219 = vmatprep.subr.mxu0 0.0
    %220 = vmatpush1.msra.mxu0 0.0
    %221 = vmatprep.subr.mxu0 0.0
    %222 = vmatpush1.msra.mxu0 0.0
    %223 = vmatprep.subr.mxu0 0.0
    %224 = vmatpush1.msra.mxu0 0.0
    %225 = vmatprep.subr.mxu0 0.0
    %226 = vmatpush1.msra.mxu0 0.0
    %227 = vmatprep.subr.mxu0 0.0
    %228 = vmatpush1.msra.mxu0 0.0
    %229 = vmatprep.subr.mxu0 0.0
    %230 = vmatpush1.msra.mxu0 0.0
    %231 = vmatprep.subr.mxu0 0.0
    %232 = vmatpush1.msra.mxu0 0.0
    %233 = vmatprep.mubr.f32.mxu0 0.0
    %234 = vmatmul.mubr.f32.gmra.mrb[0].mxu0 %v163
    %v235 = vpop.f32.mrb[0].mxu0
    %v236 = vadd.f32 %v148, %v235
    %v237 = vpop.f32.mrb[0].mxu0
    %v238 = vadd.f32 %v150, %v237
    %239 = vdwg.mxu0
    %v240 = vld [vmem:[%s4] sm:$0x3]
    %v242 = vlaneseq
    %v243 = vshrl.u32 %v242, 7
    %v244 = vsub.s32 0, %v243
    %v245 = vrot.slane %v240, %v244
    %v246 = vlaneseq
    %v247 = vshrl.u32 %v246, 7
    %v248 = vsub.s32 1, %v247
    %v249 = vrot.slane %v240, %v248
    %v252 = vadd.f32 %v236, %v245
    %v253 = vadd.f32 %v238, %v249
    %v254 = vmax.f32 %v252, 0.0
    %v255 = vmax.f32 %v253, 0.0
    %v256 = vld [vmem:[#allocation5] sm:$0xff]
    %v257 = vld [vmem:[#allocation5 + $0x8] sm:$0xff]
    %v258 = vld [vmem:[#allocation5 + $0x10] sm:$0xff]
    %v259 = vld [vmem:[#allocation5 + $0x18] sm:$0xff]
    %v260 = vld [vmem:[#allocation5 + $0x20] sm:$0xff]
    %v261 = vld [vmem:[#allocation5 + $0x28] sm:$0xff]
    %v262 = vld [vmem:[#allocation5 + $0x30] sm:$0xff]
    %v263 = vld [vmem:[#allocation5 + $0x38] sm:$0xff]
    %v264 = vld [vmem:[#allocation5 + $0x40] sm:$0xff]
    %v265 = vld [vmem:[#allocation5 + $0x48] sm:$0xff]
    %v266 = vld [vmem:[#allocation5 + $0x50] sm:$0xff]
    %v267 = vld [vmem:[#allocation5 + $0x58] sm:$0xff]
    %v268 = vld [vmem:[#allocation5 + $0x60] sm:$0xff]
    %v269 = vld [vmem:[#allocation5 + $0x68] sm:$0xff]
    %v270 = vld [vmem:[#allocation5 + $0x70] sm:$0xff]
    %v271 = vld [vmem:[#allocation5 + $0x78] sm:$0xff]
    %v272 = vld [vmem:[#allocation5 + $0x80] sm:$0xff]
    %v273 = vld [vmem:[#allocation5 + $0x88] sm:$0xff]
    %v274 = vld [vmem:[#allocation5 + $0x90] sm:$0xff]
    %v275 = vld [vmem:[#allocation5 + $0x98] sm:$0xff]
    %v276 = vld [vmem:[#allocation5 + $0xa0] sm:$0xff]
    %v277 = vld [vmem:[#allocation5 + $0xa8] sm:$0xff]
    %v278 = vld [vmem:[#allocation5 + $0xb0] sm:$0xff]
    %v279 = vld [vmem:[#allocation5 + $0xb8] sm:$0xff]
    %v280 = vld [vmem:[#allocation5 + $0xc0] sm:$0xff]
    %v281 = vld [vmem:[#allocation5 + $0xc8] sm:$0xff]
    %v282 = vld [vmem:[#allocation5 + $0xd0] sm:$0xff]
    %v283 = vld [vmem:[#allocation5 + $0xd8] sm:$0xff]
    %v284 = vld [vmem:[#allocation5 + $0xe0] sm:$0xff]
    %v285 = vld [vmem:[#allocation5 + $0xe8] sm:$0xff]
    %v286 = vld [vmem:[#allocation5 + $0xf0] sm:$0xff]
    %v287 = vld [vmem:[#allocation5 + $0xf8] sm:$0xff]
    %v288 = vld [vmem:[#allocation5 + $0x100] sm:$0xff]
    %v289 = vld [vmem:[#allocation5 + $0x108] sm:$0xff]
    %v290 = vld [vmem:[#allocation5 + $0x110] sm:$0xff]
    %v291 = vld [vmem:[#allocation5 + $0x118] sm:$0xff]
    %v292 = vld [vmem:[#allocation5 + $0x120] sm:$0xff]
    %v293 = vld [vmem:[#allocation5 + $0x128] sm:$0xff]
    %v294 = vld [vmem:[#allocation5 + $0x130] sm:$0xff]
    %v295 = vld [vmem:[#allocation5 + $0x138] sm:$0xff]
    %v296 = vld [vmem:[#allocation5 + $0x140] sm:$0xff]
    %v297 = vld [vmem:[#allocation5 + $0x148] sm:$0xff]
    %v298 = vld [vmem:[#allocation5 + $0x150] sm:$0xff]
    %v299 = vld [vmem:[#allocation5 + $0x158] sm:$0xff]
    %v300 = vld [vmem:[#allocation5 + $0x160] sm:$0xff]
    %v301 = vld [vmem:[#allocation5 + $0x168] sm:$0xff]
    %v302 = vld [vmem:[#allocation5 + $0x170] sm:$0xff]
    %v303 = vld [vmem:[#allocation5 + $0x178] sm:$0xff]
    %v304 = vld [vmem:[#allocation5 + $0x180] sm:$0xff]
    %v305 = vld [vmem:[#allocation5 + $0x188] sm:$0xff]
    %v306 = vld [vmem:[#allocation5 + $0x190] sm:$0xff]
    %v307 = vld [vmem:[#allocation5 + $0x198] sm:$0xff]
    %v308 = vld [vmem:[#allocation5 + $0x1a0] sm:$0xff]
    %v309 = vld [vmem:[#allocation5 + $0x1a8] sm:$0xff]
    %v310 = vld [vmem:[#allocation5 + $0x1b0] sm:$0xff]
    %v311 = vld [vmem:[#allocation5 + $0x1b8] sm:$0xff]
    %v312 = vld [vmem:[#allocation5 + $0x1c0] sm:$0xff]
    %v313 = vld [vmem:[#allocation5 + $0x1c8] sm:$0xff]
    %v314 = vld [vmem:[#allocation5 + $0x1d0] sm:$0xff]
    %v315 = vld [vmem:[#allocation5 + $0x1d8] sm:$0xff]
    %v316 = vld [vmem:[#allocation5 + $0x1e0] sm:$0xff]
    %v317 = vld [vmem:[#allocation5 + $0x1e8] sm:$0xff]
    %v318 = vld [vmem:[#allocation5 + $0x1f0] sm:$0xff]
    %v319 = vld [vmem:[#allocation5 + $0x1f8] sm:$0xff]
    %v320 = vld [vmem:[#allocation5 + $0x200] sm:$0xff]
    %v321 = vld [vmem:[#allocation5 + $0x208] sm:$0xff]
    %v322 = vld [vmem:[#allocation5 + $0x210] sm:$0xff]
    %v323 = vld [vmem:[#allocation5 + $0x218] sm:$0xff]
    %v324 = vld [vmem:[#allocation5 + $0x220] sm:$0xff]
    %v325 = vld [vmem:[#allocation5 + $0x228] sm:$0xff]
    %v326 = vld [vmem:[#allocation5 + $0x230] sm:$0xff]
    %v327 = vld [vmem:[#allocation5 + $0x238] sm:$0xff]
    %v328 = vld [vmem:[#allocation5 + $0x240] sm:$0xff]
    %v329 = vld [vmem:[#allocation5 + $0x248] sm:$0xff]
    %v330 = vld [vmem:[#allocation5 + $0x250] sm:$0xff]
    %v331 = vld [vmem:[#allocation5 + $0x258] sm:$0xff]
    %v332 = vld [vmem:[#allocation5 + $0x260] sm:$0xff]
    %v333 = vld [vmem:[#allocation5 + $0x268] sm:$0xff]
    %v334 = vld [vmem:[#allocation5 + $0x270] sm:$0xff]
    %v335 = vld [vmem:[#allocation5 + $0x278] sm:$0xff]
    %v336 = vld [vmem:[#allocation5 + $0x280] sm:$0xff]
    %v337 = vld [vmem:[#allocation5 + $0x288] sm:$0xff]
    %v338 = vld [vmem:[#allocation5 + $0x290] sm:$0xff]
    %v339 = vld [vmem:[#allocation5 + $0x298] sm:$0xff]
    %v340 = vld [vmem:[#allocation5 + $0x2a0] sm:$0xff]
    %v341 = vld [vmem:[#allocation5 + $0x2a8] sm:$0xff]
    %v342 = vld [vmem:[#allocation5 + $0x2b0] sm:$0xff]
    %v343 = vld [vmem:[#allocation5 + $0x2b8] sm:$0xff]
    %v344 = vld [vmem:[#allocation5 + $0x2c0] sm:$0xff]
    %v345 = vld [vmem:[#allocation5 + $0x2c8] sm:$0xff]
    %v346 = vld [vmem:[#allocation5 + $0x2d0] sm:$0xff]
    %v347 = vld [vmem:[#allocation5 + $0x2d8] sm:$0xff]
    %v348 = vld [vmem:[#allocation5 + $0x2e0] sm:$0xff]
    %v349 = vld [vmem:[#allocation5 + $0x2e8] sm:$0xff]
    %v350 = vld [vmem:[#allocation5 + $0x2f0] sm:$0xff]
    %v351 = vld [vmem:[#allocation5 + $0x2f8] sm:$0xff]
    %v352 = vld [vmem:[#allocation5 + $0x300] sm:$0xff]
    %v353 = vld [vmem:[#allocation5 + $0x308] sm:$0xff]
    %v354 = vld [vmem:[#allocation5 + $0x310] sm:$0xff]
    %v355 = vld [vmem:[#allocation5 + $0x318] sm:$0xff]
    %v356 = vld [vmem:[#allocation5 + $0x320] sm:$0xff]
    %v357 = vld [vmem:[#allocation5 + $0x328] sm:$0xff]
    %v358 = vld [vmem:[#allocation5 + $0x330] sm:$0xff]
    %v359 = vld [vmem:[#allocation5 + $0x338] sm:$0xff]
    %v360 = vld [vmem:[#allocation5 + $0x340] sm:$0xff]
    %v361 = vld [vmem:[#allocation5 + $0x348] sm:$0xff]
    %v362 = vld [vmem:[#allocation5 + $0x350] sm:$0xff]
    %v363 = vld [vmem:[#allocation5 + $0x358] sm:$0xff]
    %v364 = vld [vmem:[#allocation5 + $0x360] sm:$0xff]
    %v365 = vld [vmem:[#allocation5 + $0x368] sm:$0xff]
    %v366 = vld [vmem:[#allocation5 + $0x370] sm:$0xff]
    %v367 = vld [vmem:[#allocation5 + $0x378] sm:$0xff]
    %v368 = vld [vmem:[#allocation5 + $0x380] sm:$0xff]
    %v369 = vld [vmem:[#allocation5 + $0x388] sm:$0xff]
    %v370 = vld [vmem:[#allocation5 + $0x390] sm:$0xff]
    %v371 = vld [vmem:[#allocation5 + $0x398] sm:$0xff]
    %v372 = vld [vmem:[#allocation5 + $0x3a0] sm:$0xff]
    %v373 = vld [vmem:[#allocation5 + $0x3a8] sm:$0xff]
    %v374 = vld [vmem:[#allocation5 + $0x3b0] sm:$0xff]
    %v375 = vld [vmem:[#allocation5 + $0x3b8] sm:$0xff]
    %v376 = vld [vmem:[#allocation5 + $0x3c0] sm:$0xff]
    %v377 = vld [vmem:[#allocation5 + $0x3c8] sm:$0xff]
    %v378 = vld [vmem:[#allocation5 + $0x3d0] sm:$0xff]
    %v379 = vld [vmem:[#allocation5 + $0x3d8] sm:$0xff]
    %v380 = vld [vmem:[#allocation5 + $0x3e0] sm:$0xff]
    %v381 = vld [vmem:[#allocation5 + $0x3e8] sm:$0xff]
    %v382 = vld [vmem:[#allocation5 + $0x3f0] sm:$0xff]
    %v383 = vld [vmem:[#allocation5 + $0x3f8] sm:$0xff]
    %v384 = vld [vmem:[#allocation5 + $0x400] sm:$0xff]
    %v385 = vld [vmem:[#allocation5 + $0x408] sm:$0xff]
    %v386 = vld [vmem:[#allocation5 + $0x410] sm:$0xff]
    %v387 = vld [vmem:[#allocation5 + $0x418] sm:$0xff]
    %v388 = vld [vmem:[#allocation5 + $0x420] sm:$0xff]
    %v389 = vld [vmem:[#allocation5 + $0x428] sm:$0xff]
    %v390 = vld [vmem:[#allocation5 + $0x430] sm:$0xff]
    %v391 = vld [vmem:[#allocation5 + $0x438] sm:$0xff]
    %v392 = vld [vmem:[#allocation5 + $0x440] sm:$0xff]
    %v393 = vld [vmem:[#allocation5 + $0x448] sm:$0xff]
    %v394 = vld [vmem:[#allocation5 + $0x450] sm:$0xff]
    %v395 = vld [vmem:[#allocation5 + $0x458] sm:$0xff]
    %v396 = vld [vmem:[#allocation5 + $0x460] sm:$0xff]
    %v397 = vld [vmem:[#allocation5 + $0x468] sm:$0xff]
    %v398 = vld [vmem:[#allocation5 + $0x470] sm:$0xff]
    %v399 = vld [vmem:[#allocation5 + $0x478] sm:$0xff]
    %v400 = vld [vmem:[#allocation5 + $0x480] sm:$0xff]
    %v401 = vld [vmem:[#allocation5 + $0x488] sm:$0xff]
    %v402 = vld [vmem:[#allocation5 + $0x490] sm:$0xff]
    %v403 = vld [vmem:[#allocation5 + $0x498] sm:$0xff]
    %v404 = vld [vmem:[#allocation5 + $0x4a0] sm:$0xff]
    %v405 = vld [vmem:[#allocation5 + $0x4a8] sm:$0xff]
    %v406 = vld [vmem:[#allocation5 + $0x4b0] sm:$0xff]
    %v407 = vld [vmem:[#allocation5 + $0x4b8] sm:$0xff]
    %v408 = vld [vmem:[#allocation5 + $0x4c0] sm:$0xff]
    %v409 = vld [vmem:[#allocation5 + $0x4c8] sm:$0xff]
    %v410 = vld [vmem:[#allocation5 + $0x4d0] sm:$0xff]
    %v411 = vld [vmem:[#allocation5 + $0x4d8] sm:$0xff]
    %v412 = vld [vmem:[#allocation5 + $0x4e0] sm:$0xff]
    %v413 = vld [vmem:[#allocation5 + $0x4e8] sm:$0xff]
    %v414 = vld [vmem:[#allocation5 + $0x4f0] sm:$0xff]
    %v415 = vld [vmem:[#allocation5 + $0x4f8] sm:$0xff]
    %v416 = vld [vmem:[#allocation5 + $0x500] sm:$0xff]
    %v417 = vld [vmem:[#allocation5 + $0x508] sm:$0xff]
    %v418 = vld [vmem:[#allocation5 + $0x510] sm:$0xff]
    %v419 = vld [vmem:[#allocation5 + $0x518] sm:$0xff]
    %v420 = vld [vmem:[#allocation5 + $0x520] sm:$0xff]
    %v421 = vld [vmem:[#allocation5 + $0x528] sm:$0xff]
    %v422 = vld [vmem:[#allocation5 + $0x530] sm:$0xff]
    %v423 = vld [vmem:[#allocation5 + $0x538] sm:$0xff]
    %v424 = vld [vmem:[#allocation5 + $0x540] sm:$0xff]
    %v425 = vld [vmem:[#allocation5 + $0x548] sm:$0xff]
    %v426 = vld [vmem:[#allocation5 + $0x550] sm:$0xff]
    %v427 = vld [vmem:[#allocation5 + $0x558] sm:$0xff]
    %v428 = vld [vmem:[#allocation5 + $0x560] sm:$0xff]
    %v429 = vld [vmem:[#allocation5 + $0x568] sm:$0xff]
    %v430 = vld [vmem:[#allocation5 + $0x570] sm:$0xff]
    %v431 = vld [vmem:[#allocation5 + $0x578] sm:$0xff]
    %v432 = vld [vmem:[#allocation5 + $0x580] sm:$0xff]
    %v433 = vld [vmem:[#allocation5 + $0x588] sm:$0xff]
    %v434 = vld [vmem:[#allocation5 + $0x590] sm:$0xff]
    %v435 = vld [vmem:[#allocation5 + $0x598] sm:$0xff]
    %v436 = vld [vmem:[#allocation5 + $0x5a0] sm:$0xff]
    %v437 = vld [vmem:[#allocation5 + $0x5a8] sm:$0xff]
    %v438 = vld [vmem:[#allocation5 + $0x5b0] sm:$0xff]
    %v439 = vld [vmem:[#allocation5 + $0x5b8] sm:$0xff]
    %v440 = vld [vmem:[#allocation5 + $0x5c0] sm:$0xff]
    %v441 = vld [vmem:[#allocation5 + $0x5c8] sm:$0xff]
    %v442 = vld [vmem:[#allocation5 + $0x5d0] sm:$0xff]
    %v443 = vld [vmem:[#allocation5 + $0x5d8] sm:$0xff]
    %v444 = vld [vmem:[#allocation5 + $0x5e0] sm:$0xff]
    %v445 = vld [vmem:[#allocation5 + $0x5e8] sm:$0xff]
    %v446 = vld [vmem:[#allocation5 + $0x5f0] sm:$0xff]
    %v447 = vld [vmem:[#allocation5 + $0x5f8] sm:$0xff]
    %v448 = vld [vmem:[#allocation5 + $0x600] sm:$0xff]
    %v449 = vld [vmem:[#allocation5 + $0x608] sm:$0xff]
    %v450 = vld [vmem:[#allocation5 + $0x610] sm:$0xff]
    %v451 = vld [vmem:[#allocation5 + $0x618] sm:$0xff]
    %v452 = vld [vmem:[#allocation5 + $0x620] sm:$0xff]
    %v453 = vld [vmem:[#allocation5 + $0x628] sm:$0xff]
    %v454 = vld [vmem:[#allocation5 + $0x630] sm:$0xff]
    %v455 = vld [vmem:[#allocation5 + $0x638] sm:$0xff]
    %v456 = vld [vmem:[#allocation5 + $0x640] sm:$0xff]
    %v457 = vld [vmem:[#allocation5 + $0x648] sm:$0xff]
    %v458 = vld [vmem:[#allocation5 + $0x650] sm:$0xff]
    %v459 = vld [vmem:[#allocation5 + $0x658] sm:$0xff]
    %v460 = vld [vmem:[#allocation5 + $0x660] sm:$0xff]
    %v461 = vld [vmem:[#allocation5 + $0x668] sm:$0xff]
    %v462 = vld [vmem:[#allocation5 + $0x670] sm:$0xff]
    %v463 = vld [vmem:[#allocation5 + $0x678] sm:$0xff]
    %v464 = vld [vmem:[#allocation5 + $0x680] sm:$0xff]
    %v465 = vld [vmem:[#allocation5 + $0x688] sm:$0xff]
    %v466 = vld [vmem:[#allocation5 + $0x690] sm:$0xff]
    %v467 = vld [vmem:[#allocation5 + $0x698] sm:$0xff]
    %v468 = vld [vmem:[#allocation5 + $0x6a0] sm:$0xff]
    %v469 = vld [vmem:[#allocation5 + $0x6a8] sm:$0xff]
    %v470 = vld [vmem:[#allocation5 + $0x6b0] sm:$0xff]
    %v471 = vld [vmem:[#allocation5 + $0x6b8] sm:$0xff]
    %v472 = vld [vmem:[#allocation5 + $0x6c0] sm:$0xff]
    %v473 = vld [vmem:[#allocation5 + $0x6c8] sm:$0xff]
    %v474 = vld [vmem:[#allocation5 + $0x6d0] sm:$0xff]
    %v475 = vld [vmem:[#allocation5 + $0x6d8] sm:$0xff]
    %v476 = vld [vmem:[#allocation5 + $0x6e0] sm:$0xff]
    %v477 = vld [vmem:[#allocation5 + $0x6e8] sm:$0xff]
    %v478 = vld [vmem:[#allocation5 + $0x6f0] sm:$0xff]
    %v479 = vld [vmem:[#allocation5 + $0x6f8] sm:$0xff]
    %v480 = vld [vmem:[%s6] sm:$0xff]
    %v482 = vlaneseq
    %v483 = vshrl.u32 %v482, 7
    %v484 = vsub.s32 0, %v483
    %v485 = vrot.slane %v480, %v484
    %v486 = vlaneseq
    %v487 = vshrl.u32 %v486, 7
    %v488 = vsub.s32 1, %v487
    %v489 = vrot.slane %v480, %v488
    %v490 = vlaneseq
    %v491 = vshrl.u32 %v490, 7
    %v492 = vsub.s32 2, %v491
    %v493 = vrot.slane %v480, %v492
    %v494 = vlaneseq
    %v495 = vshrl.u32 %v494, 7
    %v496 = vsub.s32 3, %v495
    %v497 = vrot.slane %v480, %v496
    %v498 = vlaneseq
    %v499 = vshrl.u32 %v498, 7
    %v500 = vsub.s32 4, %v499
    %v501 = vrot.slane %v480, %v500
    %v502 = vlaneseq
    %v503 = vshrl.u32 %v502, 7
    %v504 = vsub.s32 5, %v503
    %v505 = vrot.slane %v480, %v504
    %v506 = vlaneseq
    %v507 = vshrl.u32 %v506, 7
    %v508 = vsub.s32 6, %v507
    %v509 = vrot.slane %v480, %v508
    %517 = vmatprep.subr.mxu0 %v257
    %518 = vmatpush1.msra.mxu0 %v256
    %519 = vmatprep.subr.mxu0 %v264
    %520 = vmatpush1.msra.mxu0 %v263
    %521 = vmatprep.subr.mxu0 %v271
    %522 = vmatpush1.msra.mxu0 %v270
    %523 = vmatprep.subr.mxu0 %v278
    %524 = vmatpush1.msra.mxu0 %v277
    %525 = vmatprep.subr.mxu0 %v285
    %526 = vmatpush1.msra.mxu0 %v284
    %527 = vmatprep.subr.mxu0 %v292
    %528 = vmatpush1.msra.mxu0 %v291
    %529 = vmatprep.subr.mxu0 %v299
    %530 = vmatpush1.msra.mxu0 %v298
    %531 = vmatprep.subr.mxu0 %v306
    %532 = vmatpush1.msra.mxu0 %v305
    %533 = vmatprep.subr.mxu0 %v313
    %534 = vmatpush1.msra.mxu0 %v312
    %535 = vmatprep.subr.mxu0 %v320
    %536 = vmatpush1.msra.mxu0 %v319
    %537 = vmatprep.subr.mxu0 %v327
    %538 = vmatpush1.msra.mxu0 %v326
    %539 = vmatprep.subr.mxu0 %v334
    %540 = vmatpush1.msra.mxu0 %v333
    %541 = vmatprep.subr.mxu0 %v341
    %542 = vmatpush1.msra.mxu0 %v340
    %543 = vmatprep.subr.mxu0 %v348
    %544 = vmatpush1.msra.mxu0 %v347
    %545 = vmatprep.subr.mxu0 %v355
    %546 = vmatpush1.msra.mxu0 %v354
    %547 = vmatprep.subr.mxu0 %v362
    %548 = vmatpush1.msra.mxu0 %v361
    %549 = vmatprep.subr.mxu0 %v369
    %550 = vmatpush1.msra.mxu0 %v368
    %551 = vmatprep.subr.mxu0 %v376
    %552 = vmatpush1.msra.mxu0 %v375
    %553 = vmatprep.subr.mxu0 %v383
    %554 = vmatpush1.msra.mxu0 %v382
    %555 = vmatprep.subr.mxu0 %v390
    %556 = vmatpush1.msra.mxu0 %v389
    %557 = vmatprep.subr.mxu0 %v397
    %558 = vmatpush1.msra.mxu0 %v396
    %559 = vmatprep.subr.mxu0 %v404
    %560 = vmatpush1.msra.mxu0 %v403
    %561 = vmatprep.subr.mxu0 %v411
    %562 = vmatpush1.msra.mxu0 %v410
    %563 = vmatprep.subr.mxu0 %v418
    %564 = vmatpush1.msra.mxu0 %v417
    %565 = vmatprep.subr.mxu0 %v425
    %566 = vmatpush1.msra.mxu0 %v424
    %567 = vmatprep.subr.mxu0 %v432
    %568 = vmatpush1.msra.mxu0 %v431
    %569 = vmatprep.subr.mxu0 %v439
    %570 = vmatpush1.msra.mxu0 %v438
    %571 = vmatprep.subr.mxu0 %v446
    %572 = vmatpush1.msra.mxu0 %v445
    %573 = vmatprep.subr.mxu0 %v453
    %574 = vmatpush1.msra.mxu0 %v452
    %575 = vmatprep.subr.mxu0 %v460
    %576 = vmatpush1.msra.mxu0 %v459
    %577 = vmatprep.subr.mxu0 %v467
    %578 = vmatpush1.msra.mxu0 %v466
    %579 = vmatprep.subr.mxu0 %v474
    %580 = vmatpush1.msra.mxu0 %v473
    %581 = vmatprep.mubr.f32.mxu0 %v255
    %582 = vmatmul.mubr.f32.gmra.mrb[0].mxu0 %v254
    %v583 = vpop.f32.mrb[0].mxu0
    %v584 = vadd.f32 %v485, %v583
    %v585 = vpop.f32.mrb[0].mxu0
    %v586 = vadd.f32 %v489, %v585
    %587 = vdwg.mxu0
    %588 = vmatprep.subr.mxu0 %v259
    %589 = vmatpush1.msra.mxu0 %v258
    %590 = vmatprep.subr.mxu0 %v266
    %591 = vmatpush1.msra.mxu0 %v265
    %592 = vmatprep.subr.mxu0 %v273
    %593 = vmatpush1.msra.mxu0 %v272
    %594 = vmatprep.subr.mxu0 %v280
    %595 = vmatpush1.msra.mxu0 %v279
    %596 = vmatprep.subr.mxu0 %v287
    %597 = vmatpush1.msra.mxu0 %v286
    %598 = vmatprep.subr.mxu0 %v294
    %599 = vmatpush1.msra.mxu0 %v293
    %600 = vmatprep.subr.mxu0 %v301
    %601 = vmatpush1.msra.mxu0 %v300
    %602 = vmatprep.subr.mxu0 %v308
    %603 = vmatpush1.msra.mxu0 %v307
    %604 = vmatprep.subr.mxu0 %v315
    %605 = vmatpush1.msra.mxu0 %v314
    %606 = vmatprep.subr.mxu0 %v322
    %607 = vmatpush1.msra.mxu0 %v321
    %608 = vmatprep.subr.mxu0 %v329
    %609 = vmatpush1.msra.mxu0 %v328
    %610 = vmatprep.subr.mxu0 %v336
    %611 = vmatpush1.msra.mxu0 %v335
    %612 = vmatprep.subr.mxu0 %v343
    %613 = vmatpush1.msra.mxu0 %v342
    %614 = vmatprep.subr.mxu0 %v350
    %615 = vmatpush1.msra.mxu0 %v349
    %616 = vmatprep.subr.mxu0 %v357
    %617 = vmatpush1.msra.mxu0 %v356
    %618 = vmatprep.subr.mxu0 %v364
    %619 = vmatpush1.msra.mxu0 %v363
    %620 = vmatprep.subr.mxu0 %v371
    %621 = vmatpush1.msra.mxu0 %v370
    %622 = vmatprep.subr.mxu0 %v378
    %623 = vmatpush1.msra.mxu0 %v377
    %624 = vmatprep.subr.mxu0 %v385
    %625 = vmatpush1.msra.mxu0 %v384
    %626 = vmatprep.subr.mxu0 %v392
    %627 = vmatpush1.msra.mxu0 %v391
    %628 = vmatprep.subr.mxu0 %v399
    %629 = vmatpush1.msra.mxu0 %v398
    %630 = vmatprep.subr.mxu0 %v406
    %631 = vmatpush1.msra.mxu0 %v405
    %632 = vmatprep.subr.mxu0 %v413
    %633 = vmatpush1.msra.mxu0 %v412
    %634 = vmatprep.subr.mxu0 %v420
    %635 = vmatpush1.msra.mxu0 %v419
    %636 = vmatprep.subr.mxu0 %v427
    %637 = vmatpush1.msra.mxu0 %v426
    %638 = vmatprep.subr.mxu0 %v434
    %639 = vmatpush1.msra.mxu0 %v433
    %640 = vmatprep.subr.mxu0 %v441
    %641 = vmatpush1.msra.mxu0 %v440
    %642 = vmatprep.subr.mxu0 %v448
    %643 = vmatpush1.msra.mxu0 %v447
    %644 = vmatprep.subr.mxu0 %v455
    %645 = vmatpush1.msra.mxu0 %v454
    %646 = vmatprep.subr.mxu0 %v462
    %647 = vmatpush1.msra.mxu0 %v461
    %648 = vmatprep.subr.mxu0 %v469
    %649 = vmatpush1.msra.mxu0 %v468
    %650 = vmatprep.subr.mxu0 %v476
    %651 = vmatpush1.msra.mxu0 %v475
    %652 = vmatprep.mubr.f32.mxu0 %v255
    %653 = vmatmul.mubr.f32.gmra.mrb[0].mxu0 %v254
    %v654 = vpop.f32.mrb[0].mxu0
    %v655 = vadd.f32 %v493, %v654
    %v656 = vpop.f32.mrb[0].mxu0
    %v657 = vadd.f32 %v497, %v656
    %658 = vdwg.mxu0
    %659 = vmatprep.subr.mxu0 %v261
    %660 = vmatpush1.msra.mxu0 %v260
    %661 = vmatprep.subr.mxu0 %v268
    %662 = vmatpush1.msra.mxu0 %v267
    %663 = vmatprep.subr.mxu0 %v275
    %664 = vmatpush1.msra.mxu0 %v274
    %665 = vmatprep.subr.mxu0 %v282
    %666 = vmatpush1.msra.mxu0 %v281
    %667 = vmatprep.subr.mxu0 %v289
    %668 = vmatpush1.msra.mxu0 %v288
    %669 = vmatprep.subr.mxu0 %v296
    %670 = vmatpush1.msra.mxu0 %v295
    %671 = vmatprep.subr.mxu0 %v303
    %672 = vmatpush1.msra.mxu0 %v302
    %673 = vmatprep.subr.mxu0 %v310
    %674 = vmatpush1.msra.mxu0 %v309
    %675 = vmatprep.subr.mxu0 %v317
    %676 = vmatpush1.msra.mxu0 %v316
    %677 = vmatprep.subr.mxu0 %v324
    %678 = vmatpush1.msra.mxu0 %v323
    %679 = vmatprep.subr.mxu0 %v331
    %680 = vmatpush1.msra.mxu0 %v330
    %681 = vmatprep.subr.mxu0 %v338
    %682 = vmatpush1.msra.mxu0 %v337
    %683 = vmatprep.subr.mxu0 %v345
    %684 = vmatpush1.msra.mxu0 %v344
    %685 = vmatprep.subr.mxu0 %v352
    %686 = vmatpush1.msra.mxu0 %v351
    %687 = vmatprep.subr.mxu0 %v359
    %688 = vmatpush1.msra.mxu0 %v358
    %689 = vmatprep.subr.mxu0 %v366
    %690 = vmatpush1.msra.mxu0 %v365
    %691 = vmatprep.subr.mxu0 %v373
    %692 = vmatpush1.msra.mxu0 %v372
    %693 = vmatprep.subr.mxu0 %v380
    %694 = vmatpush1.msra.mxu0 %v379
    %695 = vmatprep.subr.mxu0 %v387
    %696 = vmatpush1.msra.mxu0 %v386
    %697 = vmatprep.subr.mxu0 %v394
    %698 = vmatpush1.msra.mxu0 %v393
    %699 = vmatprep.subr.mxu0 %v401
    %700 = vmatpush1.msra.mxu0 %v400
    %701 = vmatprep.subr.mxu0 %v408
    %702 = vmatpush1.msra.mxu0 %v407
    %703 = vmatprep.subr.mxu0 %v415
    %704 = vmatpush1.msra.mxu0 %v414
    %705 = vmatprep.subr.mxu0 %v422
    %706 = vmatpush1.msra.mxu0 %v421
    %707 = vmatprep.subr.mxu0 %v429
    %708 = vmatpush1.msra.mxu0 %v428
    %709 = vmatprep.subr.mxu0 %v436
    %710 = vmatpush1.msra.mxu0 %v435
    %711 = vmatprep.subr.mxu0 %v443
    %712 = vmatpush1.msra.mxu0 %v442
    %713 = vmatprep.subr.mxu0 %v450
    %714 = vmatpush1.msra.mxu0 %v449
    %715 = vmatprep.subr.mxu0 %v457
    %716 = vmatpush1.msra.mxu0 %v456
    %717 = vmatprep.subr.mxu0 %v464
    %718 = vmatpush1.msra.mxu0 %v463
    %719 = vmatprep.subr.mxu0 %v471
    %720 = vmatpush1.msra.mxu0 %v470
    %721 = vmatprep.subr.mxu0 %v478
    %722 = vmatpush1.msra.mxu0 %v477
    %723 = vmatprep.mubr.f32.mxu0 %v255
    %724 = vmatmul.mubr.f32.gmra.mrb[0].mxu0 %v254
    %v725 = vpop.f32.mrb[0].mxu0
    %v726 = vadd.f32 %v501, %v725
    %v727 = vpop.f32.mrb[0].mxu0
    %v728 = vadd.f32 %v505, %v727
    %729 = vdwg.mxu0
    %730 = vmatprep.subr.mxu0 0.0
    %731 = vmatpush1.msra.mxu0 %v262
    %732 = vmatprep.subr.mxu0 0.0
    %733 = vmatpush1.msra.mxu0 %v269
    %734 = vmatprep.subr.mxu0 0.0
    %735 = vmatpush1.msra.mxu0 %v276
    %736 = vmatprep.subr.mxu0 0.0
    %737 = vmatpush1.msra.mxu0 %v283
    %738 = vmatprep.subr.mxu0 0.0
    %739 = vmatpush1.msra.mxu0 %v290
    %740 = vmatprep.subr.mxu0 0.0
    %741 = vmatpush1.msra.mxu0 %v297
    %742 = vmatprep.subr.mxu0 0.0
    %743 = vmatpush1.msra.mxu0 %v304
    %744 = vmatprep.subr.mxu0 0.0
    %745 = vmatpush1.msra.mxu0 %v311
    %746 = vmatprep.subr.mxu0 0.0
    %747 = vmatpush1.msra.mxu0 %v318
    %748 = vmatprep.subr.mxu0 0.0
    %749 = vmatpush1.msra.mxu0 %v325
    %750 = vmatprep.subr.mxu0 0.0
    %751 = vmatpush1.msra.mxu0 %v332
    %752 = vmatprep.subr.mxu0 0.0
    %753 = vmatpush1.msra.mxu0 %v339
    %754 = vmatprep.subr.mxu0 0.0
    %755 = vmatpush1.msra.mxu0 %v346
    %756 = vmatprep.subr.mxu0 0.0
    %757 = vmatpush1.msra.mxu0 %v353
    %758 = vmatprep.subr.mxu0 0.0
    %759 = vmatpush1.msra.mxu0 %v360
    %760 = vmatprep.subr.mxu0 0.0
    %761 = vmatpush1.msra.mxu0 %v367
    %762 = vmatprep.subr.mxu0 0.0
    %763 = vmatpush1.msra.mxu0 %v374
    %764 = vmatprep.subr.mxu0 0.0
    %765 = vmatpush1.msra.mxu0 %v381
    %766 = vmatprep.subr.mxu0 0.0
    %767 = vmatpush1.msra.mxu0 %v388
    %768 = vmatprep.subr.mxu0 0.0
    %769 = vmatpush1.msra.mxu0 %v395
    %770 = vmatprep.subr.mxu0 0.0
    %771 = vmatpush1.msra.mxu0 %v402
    %772 = vmatprep.subr.mxu0 0.0
    %773 = vmatpush1.msra.mxu0 %v409
    %774 = vmatprep.subr.mxu0 0.0
    %775 = vmatpush1.msra.mxu0 %v416
    %776 = vmatprep.subr.mxu0 0.0
    %777 = vmatpush1.msra.mxu0 %v423
    %778 = vmatprep.subr.mxu0 0.0
    %779 = vmatpush1.msra.mxu0 %v430
    %780 = vmatprep.subr.mxu0 0.0
    %781 = vmatpush1.msra.mxu0 %v437
    %782 = vmatprep.subr.mxu0 0.0
    %783 = vmatpush1.msra.mxu0 %v444
    %784 = vmatprep.subr.mxu0 0.0
    %785 = vmatpush1.msra.mxu0 %v451
    %786 = vmatprep.subr.mxu0 0.0
    %787 = vmatpush1.msra.mxu0 %v458
    %788 = vmatprep.subr.mxu0 0.0
    %789 = vmatpush1.msra.mxu0 %v465
    %790 = vmatprep.subr.mxu0 0.0
    %791 = vmatpush1.msra.mxu0 %v472
    %792 = vmatprep.subr.mxu0 0.0
    %793 = vmatpush1.msra.mxu0 %v479
    %794 = vmatprep.mubr.f32.mxu0 %v255
    %795 = vmatmul.mubr.f32.gmra.mrb[0].mxu0 %v254
    %v796 = vpop.f32.mrb[0].mxu0
    %v797 = vadd.f32 %v509, %v796
    %v798 = vpop.f32.mrb[0].mxu0
    %799 = vdwg.mxu0
    %v800 = vxor.u32 %v584, 2147483648
    %v801 = vxor.u32 %v586, 2147483648
    %v802 = vxor.u32 %v655, 2147483648
    %v803 = vxor.u32 %v657, 2147483648
    %v804 = vxor.u32 %v726, 2147483648
    %v805 = vxor.u32 %v728, 2147483648
    %v806 = vxor.u32 %v797, 2147483648
    %v807 = vmul.f32 %v800, 1.442695
    %v808 = vpow.pop %v807
    %v809 = vmul.f32 %v801, 1.442695
    %v810 = vpow.pop %v809
    %v811 = vmul.f32 %v802, 1.442695
    %v812 = vpow.pop %v811
    %v813 = vmul.f32 %v803, 1.442695
    %v814 = vpow.pop %v813
    %v815 = vmul.f32 %v804, 1.442695
    %v816 = vpow.pop %v815
    %v817 = vmul.f32 %v805, 1.442695
    %v818 = vpow.pop %v817
    %v819 = vmul.f32 %v806, 1.442695
    %v820 = vpow.pop %v819
    %v821 = vadd.f32 %v808, 1.0
    %v822 = vadd.f32 %v810, 1.0
    %v823 = vadd.f32 %v812, 1.0
    %v824 = vadd.f32 %v814, 1.0
    %v825 = vadd.f32 %v816, 1.0
    %v826 = vadd.f32 %v818, 1.0
    %v827 = vadd.f32 %v820, 1.0
    %v828 = vrcp.pop %v821
    %v829 = vmul.f32 1.0, %v828
    %v830 = vrcp.pop %v822
    %v831 = vmul.f32 1.0, %v830
    %v832 = vrcp.pop %v823
    %v833 = vmul.f32 1.0, %v832
    %v834 = vrcp.pop %v824
    %v835 = vmul.f32 1.0, %v834
    %v836 = vrcp.pop %v825
    %v837 = vmul.f32 1.0, %v836
    %v838 = vrcp.pop %v826
    %v839 = vmul.f32 1.0, %v838
    %v840 = vrcp.pop %v827
    %v841 = vmul.f32 1.0, %v840
    %842 = vst [vmem:[#allocation7] sm:$0xff] %v829
    %843 = vst [vmem:[#allocation7 + $0x8] sm:$0xff] %v831
    %844 = vst [vmem:[#allocation7 + $0x10] sm:$0xff] %v833
    %845 = vst [vmem:[#allocation7 + $0x18] sm:$0xff] %v835
    %846 = vst [vmem:[#allocation7 + $0x20] sm:$0xff] %v837
    %847 = vst [vmem:[#allocation7 + $0x28] sm:$0xff] %v839
    %848 = vst [vmem:[#allocation7 + $0x30] sm:$0xff] %v841
    // Predicated region
    $region38: #{tpu_custom_call.1} parent=1 // pred_check
      _
    $region39: #{tpu_custom_call.1} parent=1 // pred_check_branch
      %850 = sbr.rel (0) target = $region41
    $region40: #{tpu_custom_call.1} parent=1 // pred_region
      %s852 = ssub.s32 896, 896
      %853 = vsyncadd [#allocation4], %s852
      %s855 = sshll.u32 [#allocation7], 4
      %s856 = int_to_ptr.vmem [resolvable:$true] %s855
      %858 = dma.vmem_to_hbm [thread:$0]  %s856, 896, %s7, [#allocation4]
    $region41: #{tpu_custom_call.1} parent=1 // pred_fallthru
      _
    // Predicated region
    $region42: #{tpu_custom_call.1} parent=1 // pred_check
      _
    $region43: #{tpu_custom_call.1} parent=1 // pred_check_branch
      %860 = sbr.rel (0) target = $region45
    $region44: #{tpu_custom_call.1} parent=1 // pred_region
      %861 = dma.done [#allocation4], 896
    $region45: #{tpu_custom_call.1} parent=1 // pred_fallthru
      _
    %862 = vsyncpa [#allocation3], 1
    %863 = vsyncpa [#allocation6], 1
    %864 = vsyncpa [#allocation4], 1

</llo_original>
